<compile_context>
chip_gen: v5e
topology: v5e:2x2
jax: 0.10.0
libtpu: 0.0.40
codegen_flags: <defaults>
</compile_context>

<pallas_src>
import math
from functools import partial

import jax
import jax.numpy as jnp
from jax.experimental import pallas as pl
from jax.experimental.pallas import tpu as pltpu


def _round_up(x, m):
    return ((x + m - 1) // m) * m


# ------------------------------ Pallas kernel -------------------------------

def _pool_fc_kernel(x_ref, w_ref, b_ref, o_ref, acc_ref, *, inv_hw):
    """Fused global-average-pool + linear layer.

    x_ref  : (N, ts, C)   spatial tile of the NHWC-flattened input
    w_ref  : (C, 128)     one lane-tile of the (class-padded) FC weight
    b_ref  : (1, 128)     matching bias lane-tile
    o_ref  : (N, 128)     matching output lane-tile
    acc_ref: (N, C) f32   running spatial sum (VMEM scratch)
    grid   : (class_tiles [parallel], spatial_tiles [arbitrary])
    """
    s = pl.program_id(1)

    @pl.when(s == 0)
    def _():
        acc_ref[...] = jnp.zeros_like(acc_ref)

    # Partial sum over this spatial tile (zero-padded rows contribute nothing).
    acc_ref[...] += jnp.sum(x_ref[...], axis=1)

    @pl.when(s == pl.num_programs(1) - 1)
    def _():
        pooled = acc_ref[...] * inv_hw                       # mean over H*W
        o_ref[...] = (
            jnp.dot(pooled, w_ref[...], preferred_element_type=jnp.float32)
            + b_ref[...]
        )


# --------------------------------- wrapper ----------------------------------

def head_org_forward(x_nchw, w, b, *, spatial_tile=None,
                     vmem_budget_bytes=4 << 20):
    """x_nchw: (N, C, H, W) f32;  w: (C, num_classes);  b: (num_classes,)."""
    N, C, H, W = x_nchw.shape
    Cw, num_classes = w.shape
    assert Cw == C
    HW = H * W

    # NCHW -> (N, H*W, C): channels on the lane axis (layout plumbing in XLA).
    x = jnp.transpose(x_nchw, (0, 2, 3, 1)).reshape(N, HW, C).astype(jnp.float32)

    # Spatial tile: multiple of 8 sublanes, sized so the double-buffered input
    # block stays well inside a small VMEM budget (v7x-safe).
    if spatial_tile is None:
        ts = vmem_budget_bytes // (2 * N * C * 4)
        ts = max(8, (min(ts, 2048) // 8) * 8)
    else:
        assert spatial_tile % 8 == 0
        ts = spatial_tile
    ts = min(ts, _round_up(HW, 8))
    hw_pad = _round_up(HW, ts)
    if hw_pad != HW:
        x = jnp.pad(x, ((0, 0), (0, hw_pad - HW), (0, 0)))   # zeros: sum-neutral

    # Lane-dense output: pad the class axis up to a multiple of 128.
    nc_pad = _round_up(max(num_classes, 128), 128)
    w_p = jnp.pad(w.astype(jnp.float32), ((0, 0), (0, nc_pad - num_classes)))
    b_p = jnp.pad(b.astype(jnp.float32), (0, nc_pad - num_classes))[None, :]

    grid = (nc_pad // 128, hw_pad // ts)

    out = pl.pallas_call(
        partial(_pool_fc_kernel, inv_hw=1.0 / HW),
        out_shape=jax.ShapeDtypeStruct((N, nc_pad), jnp.float32),
        grid_spec=pltpu.PrefetchScalarGridSpec(
            num_scalar_prefetch=0,
            grid=grid,
            in_specs=[
                pl.BlockSpec((N, ts, C), lambda j, s: (0, s, 0)),   # streamed x
                pl.BlockSpec((C, 128), lambda j, s: (0, j)),        # weight tile
                pl.BlockSpec((1, 128), lambda j, s: (0, j)),        # bias tile
            ],
            out_specs=pl.BlockSpec((N, 128), lambda j, s: (0, j)),
            scratch_shapes=[pltpu.VMEM((N, C), jnp.float32)],
        ),
        compiler_params=pltpu.CompilerParams(
            dimension_semantics=("parallel", "arbitrary"),
            vmem_limit_bytes=32 * 1024 * 1024,
        ),
    )(x, w_p, b_p)

    return out[:, :num_classes]


# --------------------------- parameter construction -------------------------

def init_head_org(key, num_channels, num_classes):
    # Matches torch.nn.Linear default init: uniform(-1/sqrt(fan_in), 1/sqrt(fan_in)).
    wk, bk = jax.random.split(key)
    bound = 1.0 / math.sqrt(num_channels)
    w = jax.random.uniform(wk, (num_channels, num_classes), jnp.float32,
                           -bound, bound)
    b = jax.random.uniform(bk, (num_classes,), jnp.float32, -bound, bound)
    return w, b


# ----------------------------------- main ------------------------------------

if __name__ == "__main__":
    key = jax.random.PRNGKey(0)
    pkey, xkey = jax.random.split(key)

    N, C, H, W = 2, 64, 16, 16
    num_classes = 2
    w, b = init_head_org(pkey, C, num_classes)
    x = jax.random.normal(xkey, (N, C, H, W), jnp.float32)

    # spatial_tile=64 forces a 4-step reduction over H*W=256 so the
    # init / accumulate / finalize pipeline is exercised (the auto-picked tile
    # would cover the whole spatial extent in one step at this toy size).
    out = head_org_forward(x, w, b, spatial_tile=64)
    out = jax.block_until_ready(out)

    # Pure-JAX reference: AdaptiveAvgPool2d(1) + flatten + Linear.
    ref = jnp.mean(x, axis=(2, 3)) @ w + b

    assert out.shape == (N, num_classes) and out.dtype == jnp.float32
    assert float(jnp.max(jnp.abs(out - ref))) < 1e-4, float(jnp.max(jnp.abs(out - ref)))
    print("KERNEL_OK")
</pallas_src>

<mosaic_0001>
module attributes {stable_mosaic.version = 11 : i64} {
  func.func @_pool_fc_kernel(%arg0: i32, %arg1: i32, %arg2: memref<2x64x64xf32, #tpu.memory_space<vmem>>, %arg3: memref<64x128xf32, #tpu.memory_space<vmem>>, %arg4: memref<1x128xf32, #tpu.memory_space<vmem>>, %arg5: memref<2x128xf32, #tpu.memory_space<vmem>>, %arg6: memref<2x64xf32, #tpu.memory_space<vmem>>) attributes {dimension_semantics = [#tpu.dimension_semantics<parallel>, #tpu.dimension_semantics<arbitrary>], iteration_bounds = array<i64: 1, 4>, scalar_prefetch = 0 : i64, scratch_operands = 1 : i64, tpu.core_type = #tpu.core_type<tc>, window_params = [{transform_indices = @transform_0, window_bounds = array<i64: 2, 64, 64>}, {transform_indices = @transform_1, window_bounds = array<i64: 64, 128>}, {transform_indices = @transform_2, window_bounds = array<i64: 1, 128>}, {transform_indices = @transform_3, window_bounds = array<i64: 2, 128>}]} {
    %c0_i32 = arith.constant 0 : i32
    %0 = arith.cmpi eq, %arg1, %c0_i32 : i32
    %1 = arith.extui %0 : i1 to i32
    %c0_i32_0 = arith.constant 0 : i32
    %2 = arith.cmpi ne, %1, %c0_i32_0 : i32
    scf.if %2 {
      %cst_8 = arith.constant 0.000000e+00 : f32
      %11 = vector.broadcast %cst_8 : f32 to vector<2x64xf32>
      %c0_9 = arith.constant 0 : index
      %c0_10 = arith.constant 0 : index
      %12 = vector.load %arg6[%c0_9, %c0_10] : memref<2x64xf32, #tpu.memory_space<vmem>>, vector<2x64xf32>
      tpu.vector_store %arg6[%c0_9, %c0_10], %11 {strides = array<i32>} : memref<2x64xf32, #tpu.memory_space<vmem>>, vector<2x64xf32>,
    } else {
    }
    %c0 = arith.constant 0 : index
    %c0_1 = arith.constant 0 : index
    %3 = vector.load %arg6[%c0, %c0_1] : memref<2x64xf32, #tpu.memory_space<vmem>>, vector<2x64xf32>
    %c0_2 = arith.constant 0 : index
    %c0_3 = arith.constant 0 : index
    %c0_4 = arith.constant 0 : index
    %4 = vector.load %arg2[%c0_2, %c0_3, %c0_4] : memref<2x64x64xf32, #tpu.memory_space<vmem>>, vector<2x64x64xf32>
    %cst = arith.constant dense<0.000000e+00> : vector<2x64xf32>
    %5 = vector.multi_reduction <add>, %4, %cst [1] : vector<2x64x64xf32> to vector<2x64xf32>
    %6 = arith.addf %3, %5 : vector<2x64xf32>
    %c0_5 = arith.constant 0 : index
    %c0_6 = arith.constant 0 : index
    %7 = vector.load %arg6[%c0_5, %c0_6] : memref<2x64xf32, #tpu.memory_space<vmem>>, vector<2x64xf32>
    tpu.vector_store %arg6[%c0_5, %c0_6], %6 {strides = array<i32>} : memref<2x64xf32, #tpu.memory_space<vmem>>, vector<2x64xf32>,
    %c3_i32 = arith.constant 3 : i32
    %8 = arith.cmpi eq, %arg1, %c3_i32 : i32
    %9 = arith.extui %8 : i1 to i32
    %c0_i32_7 = arith.constant 0 : i32
    %10 = arith.cmpi ne, %9, %c0_i32_7 : i32
    scf.if %10 {
      %c0_8 = arith.constant 0 : index
      %c0_9 = arith.constant 0 : index
      %11 = vector.load %arg6[%c0_8, %c0_9] : memref<2x64xf32, #tpu.memory_space<vmem>>, vector<2x64xf32>
      %cst_10 = arith.constant 3.906250e-03 : f32
      %12 = vector.broadcast %cst_10 : f32 to vector<2x64xf32>
      %13 = arith.mulf %11, %12 : vector<2x64xf32>
      %c0_11 = arith.constant 0 : index
      %c0_12 = arith.constant 0 : index
      %14 = vector.load %arg3[%c0_11, %c0_12] : memref<64x128xf32, #tpu.memory_space<vmem>>, vector<64x128xf32>
      %cst_13 = arith.constant dense<0.000000e+00> : vector<2x128xf32>
      %15 = tpu.matmul %13, %14, %cst_13 {dimension_numbers = #tpu.dot_dimension_numbers<[1], [0], [0], [1], [0, 0, 1, 1], [], []>} : vector<2x64xf32>, vector<64x128xf32>, vector<2x128xf32> -> vector<2x128xf32>
      %c0_14 = arith.constant 0 : index
      %c0_15 = arith.constant 0 : index
      %16 = vector.load %arg4[%c0_14, %c0_15] : memref<1x128xf32, #tpu.memory_space<vmem>>, vector<1x128xf32>
      %17 = vector.broadcast %16 : vector<1x128xf32> to vector<2x128xf32>
      %18 = arith.addf %15, %17 : vector<2x128xf32>
      %c0_16 = arith.constant 0 : index
      %c0_17 = arith.constant 0 : index
      %19 = vector.load %arg5[%c0_16, %c0_17] : memref<2x128xf32, #tpu.memory_space<vmem>>, vector<2x128xf32>
      tpu.vector_store %arg5[%c0_16, %c0_17], %18 {strides = array<i32>} : memref<2x128xf32, #tpu.memory_space<vmem>>, vector<2x128xf32>,
    } else {
    }
    return
  }
  func.func @transform_0(%arg0: i32, %arg1: i32) -> (i32, i32, i32) {
    %c0_i32 = arith.constant 0 : i32
    %c0_i32_0 = arith.constant 0 : i32
    %c0_i32_1 = arith.constant 0 : i32
    return %c0_i32, %arg1, %c0_i32_0 : i32, i32, i32
  }
  func.func @transform_1(%arg0: i32, %arg1: i32) -> (i32, i32) {
    %c0_i32 = arith.constant 0 : i32
    %c0_i32_0 = arith.constant 0 : i32
    return %c0_i32, %arg0 : i32, i32
  }
  func.func @transform_2(%arg0: i32, %arg1: i32) -> (i32, i32) {
    %c0_i32 = arith.constant 0 : i32
    %c0_i32_0 = arith.constant 0 : i32
    return %c0_i32, %arg0 : i32, i32
  }
  func.func @transform_3(%arg0: i32, %arg1: i32) -> (i32, i32) {
    %c0_i32 = arith.constant 0 : i32
    %c0_i32_0 = arith.constant 0 : i32
    return %c0_i32, %arg0 : i32, i32
  }
}

</mosaic_0001>

<llo_original>
// kernel: tpu_custom_call.1
$region0: #{tpu_custom_call.1}
  #allocation0 [shape = 'u32[]', space=smem, size = 0x4, offset = 0x4, fixed_abs, tag = 'smem constant byte address 0x4 - core index']
  #allocation1 [shape = 'u32[72,128]{1,0:T(1,128)}', space=vmem, size = 0x9000, scoped, tag = 'internal scratch']
  #allocation2 [shape = 'f32[2,64]{1,0:T(2,128)}', space=vmem, size = 0x400, scoped, tag = 'scratch operand']
  %s0 = inlined_call_operand.vmem [shape: f32[2,256,64], index: 0, kind: input, shape index: {}]
  %s1 = inlined_call_operand.vmem [shape: f32[64,128], index: 1, kind: input, shape index: {}]
  %s2 = inlined_call_operand.vmem [shape: f32[1,128], index: 2, kind: input, shape index: {}]
  %s3 = inlined_call_operand.hbm [shape: f32[2,128], index: 3, kind: output, shape index: {}]
  %s4 = sld [smem:[#allocation0]]
  $region91: #{tpu_custom_call.1} parent=0
    _
  %s6 = ssub.s32 1, %s4
  %s7 = scalar_select 0, %s6, %s4
  $region1: #{tpu_custom_call.1} parent=0
    #allocation3 [shape = 'u8[131072]{0}', space=vmem, size = 0x20000, scoped, tag = 'input window, operand 0']
    #allocation4 [shape = 'u8[1024]{0}', space=vmem, size = 0x400, scoped, tag = 'output window, operand 0, single buffered']
    #allocation5 [shape = 's32[2]{0}', space=sflag, size = 0x8, scoped, tag = 'scoped memory for tpu_custom_call.1']
    %8 = vsyncpa [#allocation5], 0
    loop: start=0, step=1, limit=6
    $region2: #{tpu_custom_call.1} parent=1 // loop_pre_header
      _
    $region3: #{tpu_custom_call.1} parent=1 // loop_header
      %s10 = sphi 0, %s14
      %p11 = scmp.ge.s32.totalorder %s10, 6
      %s17 = sphi 0, %s29
      %s18 = sphi 0, %s25
      %s19 = sphi 0, %s17
      %s20 = sphi 0, %s18
      %s21 = sphi 0, %s19
      %s22 = sphi 0, %s20
      %s32 = sphi 0, %s34
      %s35 = sphi 0, %s32
      %s36 = sphi 0, %s35
      %s52 = sphi 0, %s36
      %s58 = sphi 0, %s60
      %s61 = sphi 0, %s58
      %s62 = sphi 0, %s61
      %s78 = sphi 0, %s62
      %s84 = sphi 0, %s86
      %s87 = sphi 0, %s84
      %s88 = sphi 0, %s87
      %s104 = sphi 0, %s88
      %s110 = sphi 0, %s112
      %s113 = sphi 0, %s110
      %s114 = sphi 0, %s113
      %s130 = sphi 0, %s114
    $region4: #{tpu_custom_call.1} parent=1 // loop_header_branch
      %13 = sbr.rel (%p11) target = $region8
    $region5: #{tpu_custom_call.1} parent=1 // loop_body
      %s15 = ssub.s32 %s10, 1
      %s16 = ssub.s32 %s10, 2
      %s23 = sadd.s32 1, %s18
      %p24 = scmp.ge.s32.totalorder %s23, 4
      %s25 = scalar_select %p24, 0, %s23
      %s26 = sadd.s32 1, %s17
      %s27 = scalar_select %p24, %s26, %s17
      %p28 = scmp.ge.s32.totalorder %s27, 1
      %s29 = scalar_select %p28, 0, %s27
      %s30 = ssub.s32 %s18, %s25
      %p31 = scmp.eq.s32.totalorder %s30, 0
      %s33 = sadd.s32 %s32, 1
      %s34 = scalar_select %p31, %s32, %s33
      %p37 = pneg %p31
      %p38 = scmp.eq.s32.totalorder %s10, 3
      %p39 = por %p37, %p38
      %p40 = scmp.ne.s32.totalorder %s32, %s35
      %p41 = scmp.eq.s32.totalorder %s10, 0
      %p42 = por %p40, %p41
      %p43 = scmp.ne.s32.totalorder %s32, %s35
      %p44 = scmp.eq.s32.totalorder %s15, 3
      %p45 = por %p43, %p44
      %p46 = scmp.ne.s32.totalorder %s35, %s36
      %p47 = scmp.eq.s32.totalorder %s15, 0
      %p48 = por %p46, %p47
      %p49 = scmp.ne.s32.totalorder %s35, %s36
      %p50 = scmp.eq.s32.totalorder %s16, 3
      %p51 = por %p49, %p50
      %p53 = scmp.ne.s32.totalorder %s36, %s52
      %p54 = scmp.eq.s32.totalorder %s16, 0
      %p55 = por %p53, %p54
      %s56 = ssub.s32 %s17, %s29
      %p57 = scmp.eq.s32.totalorder %s56, 0
      %s59 = sadd.s32 %s58, 1
      %s60 = scalar_select %p57, %s58, %s59
      %p63 = pneg %p57
      %p64 = scmp.eq.s32.totalorder %s10, 3
      %p65 = por %p63, %p64
      %p66 = scmp.ne.s32.totalorder %s58, %s61
      %p67 = scmp.eq.s32.totalorder %s10, 0
      %p68 = por %p66, %p67
      %p69 = scmp.ne.s32.totalorder %s58, %s61
      %p70 = scmp.eq.s32.totalorder %s15, 3
      %p71 = por %p69, %p70
      %p72 = scmp.ne.s32.totalorder %s61, %s62
      %p73 = scmp.eq.s32.totalorder %s15, 0
      %p74 = por %p72, %p73
      %p75 = scmp.ne.s32.totalorder %s61, %s62
      %p76 = scmp.eq.s32.totalorder %s16, 3
      %p77 = por %p75, %p76
      %p79 = scmp.ne.s32.totalorder %s62, %s78
      %p80 = scmp.eq.s32.totalorder %s16, 0
      %p81 = por %p79, %p80
      %s82 = ssub.s32 %s17, %s29
      %p83 = scmp.eq.s32.totalorder %s82, 0
      %s85 = sadd.s32 %s84, 1
      %s86 = scalar_select %p83, %s84, %s85
      %p89 = pneg %p83
      %p90 = scmp.eq.s32.totalorder %s10, 3
      %p91 = por %p89, %p90
      %p92 = scmp.ne.s32.totalorder %s84, %s87
      %p93 = scmp.eq.s32.totalorder %s10, 0
      %p94 = por %p92, %p93
      %p95 = scmp.ne.s32.totalorder %s84, %s87
      %p96 = scmp.eq.s32.totalorder %s15, 3
      %p97 = por %p95, %p96
      %p98 = scmp.ne.s32.totalorder %s87, %s88
      %p99 = scmp.eq.s32.totalorder %s15, 0
      %p100 = por %p98, %p99
      %p101 = scmp.ne.s32.totalorder %s87, %s88
      %p102 = scmp.eq.s32.totalorder %s16, 3
      %p103 = por %p101, %p102
      %p105 = scmp.ne.s32.totalorder %s88, %s104
      %p106 = scmp.eq.s32.totalorder %s16, 0
      %p107 = por %p105, %p106
      %s108 = ssub.s32 %s17, %s29
      %p109 = scmp.eq.s32.totalorder %s108, 0
      %s111 = sadd.s32 %s110, 1
      %s112 = scalar_select %p109, %s110, %s111
      %p115 = pneg %p109
      %p116 = scmp.eq.s32.totalorder %s10, 3
      %p117 = por %p115, %p116
      %p118 = scmp.ne.s32.totalorder %s110, %s113
      %p119 = scmp.eq.s32.totalorder %s10, 0
      %p120 = por %p118, %p119
      %p121 = scmp.ne.s32.totalorder %s110, %s113
      %p122 = scmp.eq.s32.totalorder %s15, 3
      %p123 = por %p121, %p122
      %p124 = scmp.ne.s32.totalorder %s113, %s114
      %p125 = scmp.eq.s32.totalorder %s15, 0
      %p126 = por %p124, %p125
      %p127 = scmp.ne.s32.totalorder %s113, %s114
      %p128 = scmp.eq.s32.totalorder %s16, 3
      %p129 = por %p127, %p128
      %p131 = scmp.ne.s32.totalorder %s114, %s130
      %p132 = scmp.eq.s32.totalorder %s16, 0
      %p133 = por %p131, %p132
      %p134 = scmp.le.s32.totalorder 1, %s10
      %p135 = scmp.lt.s32.totalorder %s10, 5
      %p136 = pnand %p134, %p135
      %p137 = pneg %p136
      // Predicated region
      $region9: #{tpu_custom_call.1} parent=5 // pred_check
        _
      $region10: #{tpu_custom_call.1} parent=5 // pred_check_branch
        %139 = sbr.rel (%p136) target = $region12
      $region11: #{tpu_custom_call.1} parent=5 // pred_region
        %s140 = ssub.s32 %s10, 1
        // Predicated region
        $region13: #{tpu_custom_call.1} parent=11 // pred_check
          %p141 = pneg %p74
        $region14: #{tpu_custom_call.1} parent=11 // pred_check_branch
          %143 = sbr.rel (%p141) target = $region16
        $region15: #{tpu_custom_call.1} parent=11 // pred_region
          %p144 = scmp.lt.s32.totalorder %s19, 0
          %s145 = scalar_select %p144, %s19, 0
          %s146 = smul.addr %s145, 8
          %s147 = scalar_lea.vmem %s1, %s146
        $region16: #{tpu_custom_call.1} parent=11 // pred_fallthru
          _
        // Predicated region
        $region17: #{tpu_custom_call.1} parent=11 // pred_check
          %p148 = pneg %p100
        $region18: #{tpu_custom_call.1} parent=11 // pred_check_branch
          %150 = sbr.rel (%p148) target = $region20
        $region19: #{tpu_custom_call.1} parent=11 // pred_region
          %p151 = scmp.lt.s32.totalorder %s19, 0
          %s152 = scalar_select %p151, %s19, 0
          %s153 = scalar_lea.vmem %s2, %s152
        $region20: #{tpu_custom_call.1} parent=11 // pred_fallthru
          _
      $region12: #{tpu_custom_call.1} parent=5 // pred_fallthru
        _
      %p154 = scmp.lt.s32.totalorder %s10, 4
      // Predicated region
      $region21: #{tpu_custom_call.1} parent=5 // pred_check
        %p155 = pneg %p154
      $region22: #{tpu_custom_call.1} parent=5 // pred_check_branch
        %157 = sbr.rel (%p155) target = $region24
      $region23: #{tpu_custom_call.1} parent=5 // pred_region
        // Predicated region
        $region25: #{tpu_custom_call.1} parent=23 // pred_check
          %p158 = pneg %p42
        $region26: #{tpu_custom_call.1} parent=23 // pred_check_branch
          %160 = sbr.rel (%p158) target = $region28
        $region27: #{tpu_custom_call.1} parent=23 // pred_region
          %s161 = sand.u32 %s32, 1
          %s162 = sand.u32 %s32, 1
          %s163 = smul.addr %s162, 128
          %s164 = scalar_lea.vmem [#allocation3], %s163
          %s165 = smul.u32 8, %s18
          %s166 = smul.addr %s165, 8
          %s167 = scalar_lea.vmem %s0, %s166
          // Predicated region
          $region29: #{tpu_custom_call.1} parent=27 // pred_check
            _
          $region30: #{tpu_custom_call.1} parent=27 // pred_check_branch
            %169 = sbr.rel (0) target = $region32
          $region31: #{tpu_custom_call.1} parent=27 // pred_region
            // Predicated region
            $region33: #{tpu_custom_call.1} parent=31 // pred_check
              _
            $region34: #{tpu_custom_call.1} parent=31 // pred_check_branch
              %171 = sbr.rel (0) target = $region36
            $region35: #{tpu_custom_call.1} parent=31 // pred_region
              // Predicated region
              $region48: #{tpu_custom_call.1} parent=35 // pred_check
                _
              $region49: #{tpu_custom_call.1} parent=35 // pred_check_branch
                %217 = sbr.rel (0) target = $region51
              $region50: #{tpu_custom_call.1} parent=35 // pred_region
                loop: start=0, step=1, limit=1
                $region52: #{tpu_custom_call.1} parent=50 // loop_pre_header
                  _
                $region53: #{tpu_custom_call.1} parent=50 // loop_header
                  %s219 = sphi 0, %s223
                  %p220 = scmp.ge.s32.totalorder %s219, 1
                  %s224 = sphi %s167, %s167
                  %s225 = sphi %s164, %s164
                $region54: #{tpu_custom_call.1} parent=50 // loop_header_branch
                  %222 = sbr.rel (%p220) target = $region58
                $region55: #{tpu_custom_call.1} parent=50 // loop_body
                  %v226 = vld [vmem:[%s224] sm:$0xff]
                  %227 = vst [vmem:[%s225] sm:$0xff] %v226
                  %v228 = vld [vmem:[%s224 + $0x8] sm:$0xff]
                  %229 = vst [vmem:[%s225 + $0x8] sm:$0xff] %v228
                  %v230 = vld [vmem:[%s224 + $0x10] sm:$0xff]
                  %231 = vst [vmem:[%s225 + $0x10] sm:$0xff] %v230
                  %v232 = vld [vmem:[%s224 + $0x18] sm:$0xff]
                  %233 = vst [vmem:[%s225 + $0x18] sm:$0xff] %v232
                  %v234 = vld [vmem:[%s224 + $0x20] sm:$0xff]
                  %235 = vst [vmem:[%s225 + $0x20] sm:$0xff] %v234
                  %v236 = vld [vmem:[%s224 + $0x28] sm:$0xff]
                  %237 = vst [vmem:[%s225 + $0x28] sm:$0xff] %v236
                  %v238 = vld [vmem:[%s224 + $0x30] sm:$0xff]
                  %239 = vst [vmem:[%s225 + $0x30] sm:$0xff] %v238
                  %v240 = vld [vmem:[%s224 + $0x38] sm:$0xff]
                  %241 = vst [vmem:[%s225 + $0x38] sm:$0xff] %v240
                  %v242 = vld [vmem:[%s224 + $0x100] sm:$0xff]
                  %243 = vst [vmem:[%s225 + $0x40] sm:$0xff] %v242
                  %v244 = vld [vmem:[%s224 + $0x108] sm:$0xff]
                  %245 = vst [vmem:[%s225 + $0x48] sm:$0xff] %v244
                  %v246 = vld [vmem:[%s224 + $0x110] sm:$0xff]
                  %247 = vst [vmem:[%s225 + $0x50] sm:$0xff] %v246
                  %v248 = vld [vmem:[%s224 + $0x118] sm:$0xff]
                  %249 = vst [vmem:[%s225 + $0x58] sm:$0xff] %v248
                  %v250 = vld [vmem:[%s224 + $0x120] sm:$0xff]
                  %251 = vst [vmem:[%s225 + $0x60] sm:$0xff] %v250
                  %v252 = vld [vmem:[%s224 + $0x128] sm:$0xff]
                  %253 = vst [vmem:[%s225 + $0x68] sm:$0xff] %v252
                  %v254 = vld [vmem:[%s224 + $0x130] sm:$0xff]
                  %255 = vst [vmem:[%s225 + $0x70] sm:$0xff] %v254
                  %v256 = vld [vmem:[%s224 + $0x138] sm:$0xff]
                  %257 = vst [vmem:[%s225 + $0x78] sm:$0xff] %v256
                $region56: #{tpu_custom_call.1} parent=50 // loop_footer
                  %s223 = sadd.s32 1, %s219
                $region57: #{tpu_custom_call.1} parent=50 // loop_footer_branch
                  %218 = sbr.rel target = $region53
                $region58: #{tpu_custom_call.1} parent=50 // loop_exit
                  _
              $region51: #{tpu_custom_call.1} parent=35 // pred_fallthru
                _
              // Predicated region
              $region59: #{tpu_custom_call.1} parent=35 // pred_check
                _
              $region60: #{tpu_custom_call.1} parent=35 // pred_check_branch
                %259 = sbr.rel target = $region62
              $region61: #{tpu_custom_call.1} parent=35 // pred_region
                _
              $region62: #{tpu_custom_call.1} parent=35 // pred_fallthru
                _
            $region36: #{tpu_custom_call.1} parent=31 // pred_fallthru
              _
            // Predicated region
            $region37: #{tpu_custom_call.1} parent=31 // pred_check
              _
            $region38: #{tpu_custom_call.1} parent=31 // pred_check_branch
              %173 = sbr.rel target = $region40
            $region39: #{tpu_custom_call.1} parent=31 // pred_region
              %s175 = ssub.s32 256, 1
              loop: start=0, step=1, limit=1
              $region41: #{tpu_custom_call.1} parent=39 // loop_pre_header
                _
              $region42: #{tpu_custom_call.1} parent=39 // loop_header
                %s177 = sphi 0, %s181
                %p178 = scmp.ge.s32.totalorder %s177, 1
                %s182 = sphi %s167, %s167
                %s183 = sphi %s164, %s164
              $region43: #{tpu_custom_call.1} parent=39 // loop_header_branch
                %180 = sbr.rel (%p178) target = $region47
              $region44: #{tpu_custom_call.1} parent=39 // loop_body
                %v184 = vld [vmem:[%s182] sm:%s175]
                %185 = vst [vmem:[%s183] sm:%s175] %v184
                %v186 = vld [vmem:[%s182 + $0x8] sm:%s175]
                %187 = vst [vmem:[%s183 + $0x8] sm:%s175] %v186
                %v188 = vld [vmem:[%s182 + $0x10] sm:%s175]
                %189 = vst [vmem:[%s183 + $0x10] sm:%s175] %v188
                %v190 = vld [vmem:[%s182 + $0x18] sm:%s175]
                %191 = vst [vmem:[%s183 + $0x18] sm:%s175] %v190
                %v192 = vld [vmem:[%s182 + $0x20] sm:%s175]
                %193 = vst [vmem:[%s183 + $0x20] sm:%s175] %v192
                %v194 = vld [vmem:[%s182 + $0x28] sm:%s175]
                %195 = vst [vmem:[%s183 + $0x28] sm:%s175] %v194
                %v196 = vld [vmem:[%s182 + $0x30] sm:%s175]
                %197 = vst [vmem:[%s183 + $0x30] sm:%s175] %v196
                %v198 = vld [vmem:[%s182 + $0x38] sm:%s175]
                %199 = vst [vmem:[%s183 + $0x38] sm:%s175] %v198
                %v200 = vld [vmem:[%s182 + $0x100] sm:%s175]
                %201 = vst [vmem:[%s183 + $0x40] sm:%s175] %v200
                %v202 = vld [vmem:[%s182 + $0x108] sm:%s175]
                %203 = vst [vmem:[%s183 + $0x48] sm:%s175] %v202
                %v204 = vld [vmem:[%s182 + $0x110] sm:%s175]
                %205 = vst [vmem:[%s183 + $0x50] sm:%s175] %v204
                %v206 = vld [vmem:[%s182 + $0x118] sm:%s175]
                %207 = vst [vmem:[%s183 + $0x58] sm:%s175] %v206
                %v208 = vld [vmem:[%s182 + $0x120] sm:%s175]
                %209 = vst [vmem:[%s183 + $0x60] sm:%s175] %v208
                %v210 = vld [vmem:[%s182 + $0x128] sm:%s175]
                %211 = vst [vmem:[%s183 + $0x68] sm:%s175] %v210
                %v212 = vld [vmem:[%s182 + $0x130] sm:%s175]
                %213 = vst [vmem:[%s183 + $0x70] sm:%s175] %v212
                %v214 = vld [vmem:[%s182 + $0x138] sm:%s175]
                %215 = vst [vmem:[%s183 + $0x78] sm:%s175] %v214
              $region45: #{tpu_custom_call.1} parent=39 // loop_footer
                %s181 = sadd.s32 1, %s177
              $region46: #{tpu_custom_call.1} parent=39 // loop_footer_branch
                %176 = sbr.rel target = $region42
              $region47: #{tpu_custom_call.1} parent=39 // loop_exit
                _
            $region40: #{tpu_custom_call.1} parent=31 // pred_fallthru
              _
          $region32: #{tpu_custom_call.1} parent=27 // pred_fallthru
            _
          %260 = vnop
        $region28: #{tpu_custom_call.1} parent=23 // pred_fallthru
          _
      $region24: #{tpu_custom_call.1} parent=5 // pred_fallthru
        _
      %p261 = scmp.le.s32.totalorder 1, %s10
      %p262 = scmp.lt.s32.totalorder %s10, 5
      %p263 = pnand %p261, %p262
      %p264 = pneg %p263
      // Predicated region
      $region63: #{tpu_custom_call.1} parent=5 // pred_check
        _
      $region64: #{tpu_custom_call.1} parent=5 // pred_check_branch
        %266 = sbr.rel (%p263) target = $region66
      $region65: #{tpu_custom_call.1} parent=5 // pred_region
        %s267 = ssub.s32 %s10, 1
        %s268 = sand.u32 %s35, 1
        %s269 = sand.u32 %s35, 1
        %s270 = smul.addr %s269, 128
        %s271 = scalar_lea.vmem [#allocation3], %s270
        // Predicated region
        $region67: #{tpu_custom_call.1} parent=65 // pred_check
          %p272 = pneg %p48
        $region68: #{tpu_custom_call.1} parent=65 // pred_check_branch
          %274 = sbr.rel (%p272) target = $region70
        $region69: #{tpu_custom_call.1} parent=65 // pred_region
          _
        $region70: #{tpu_custom_call.1} parent=65 // pred_fallthru
          _
        %s275 = sand.u32 %s35, 1
        %s276 = sand.u32 %s35, 1
        %s277 = smul.addr %s276, 128
        %s278 = scalar_lea.vmem [#allocation3], %s277
        %p279 = pneg %p48
        %p280 = pneg %p45
        %p281 = scmp.lt.s32.totalorder %s19, 0
        %s282 = scalar_select %p281, %s19, 0
        %s283 = smul.addr %s282, 8
        %s284 = scalar_lea.vmem %s1, %s283
        %p285 = pneg %p74
        %p286 = pneg %p71
        %p287 = scmp.lt.s32.totalorder %s19, 0
        %s288 = scalar_select %p287, %s19, 0
        %s289 = scalar_lea.vmem %s2, %s288
        %p290 = pneg %p100
        %p291 = pneg %p97
        %p292 = pneg %p126
        %p293 = pneg %p123
        %s294 = smul.u32 8, %s20
        %p295 = scmp.lt.s32.totalorder %s19, 0
        %s296 = scalar_select %p295, %s19, 0
        %s297 = smul.addr %s296, 8
        %s298 = scalar_lea.vmem %s1, %s297
        %p299 = scmp.lt.s32.totalorder %s19, 0
        %s300 = scalar_select %p299, %s19, 0
        %s301 = scalar_lea.vmem %s2, %s300
        %p302 = scmp.eq.s32.totalorder %s20, 0
        // Predicated region
        $region71: #{tpu_custom_call.1} parent=65 // pred_check
          %p303 = pneg %p302
        $region72: #{tpu_custom_call.1} parent=65 // pred_check_branch
          %305 = sbr.rel (%p303) target = $region74
        $region73: #{tpu_custom_call.1} parent=65 // pred_region
          %vm306 = vcmask 517120
          %307 = vst.msk [vmem:[#allocation2] sm:$0x3] %vm306, 0.0
        $region74: #{tpu_custom_call.1} parent=65 // pred_fallthru
          _
        %v308 = vld [vmem:[#allocation2] sm:$0x3]
        %v309 = vld [vmem:[%s271] sm:$0xff]
        %v310 = vld [vmem:[%s271 + $0x8] sm:$0xff]
        %v311 = vld [vmem:[%s271 + $0x10] sm:$0xff]
        %v312 = vld [vmem:[%s271 + $0x18] sm:$0xff]
        %v313 = vld [vmem:[%s271 + $0x20] sm:$0xff]
        %v314 = vld [vmem:[%s271 + $0x28] sm:$0xff]
        %v315 = vld [vmem:[%s271 + $0x30] sm:$0xff]
        %v316 = vld [vmem:[%s271 + $0x38] sm:$0xff]
        %v317 = vld [vmem:[%s271 + $0x40] sm:$0xff]
        %v318 = vld [vmem:[%s271 + $0x48] sm:$0xff]
        %v319 = vld [vmem:[%s271 + $0x50] sm:$0xff]
        %v320 = vld [vmem:[%s271 + $0x58] sm:$0xff]
        %v321 = vld [vmem:[%s271 + $0x60] sm:$0xff]
        %v322 = vld [vmem:[%s271 + $0x68] sm:$0xff]
        %v323 = vld [vmem:[%s271 + $0x70] sm:$0xff]
        %v324 = vld [vmem:[%s271 + $0x78] sm:$0xff]
        %vm325 = vcmask 523264
        %v326 = vsel %vm325, %v309, 0.0
        %v327 = vsel %vm325, %v310, 0.0
        %v328 = vadd.f32 %v326, %v327
        %v329 = vsel %vm325, %v311, 0.0
        %v330 = vadd.f32 %v328, %v329
        %v331 = vsel %vm325, %v312, 0.0
        %v332 = vadd.f32 %v330, %v331
        %v333 = vsel %vm325, %v313, 0.0
        %v334 = vadd.f32 %v332, %v333
        %v335 = vsel %vm325, %v314, 0.0
        %v336 = vadd.f32 %v334, %v335
        %v337 = vsel %vm325, %v315, 0.0
        %v338 = vadd.f32 %v336, %v337
        %v339 = vsel %vm325, %v316, 0.0
        %v340 = vadd.f32 %v338, %v339
        %v341 = vrot.slane %v340, 4
        %v342 = vadd.f32 %v340, %v341
        %v343 = vrot.slane %v342, 2
        %v344 = vadd.f32 %v342, %v343
        %v345 = vrot.slane %v344, 1
        %v346 = vadd.f32 %v344, %v345
        %v347 = vsel %vm325, %v317, 0.0
        %v348 = vsel %vm325, %v318, 0.0
        %v349 = vadd.f32 %v347, %v348
        %v350 = vsel %vm325, %v319, 0.0
        %v351 = vadd.f32 %v349, %v350
        %v352 = vsel %vm325, %v320, 0.0
        %v353 = vadd.f32 %v351, %v352
        %v354 = vsel %vm325, %v321, 0.0
        %v355 = vadd.f32 %v353, %v354
        %v356 = vsel %vm325, %v322, 0.0
        %v357 = vadd.f32 %v355, %v356
        %v358 = vsel %vm325, %v323, 0.0
        %v359 = vadd.f32 %v357, %v358
        %v360 = vsel %vm325, %v324, 0.0
        %v361 = vadd.f32 %v359, %v360
        %v362 = vrot.slane %v361, 4
        %v363 = vadd.f32 %v361, %v362
        %v364 = vrot.slane %v363, 2
        %v365 = vadd.f32 %v363, %v364
        %v366 = vrot.slane %v365, 1
        %v367 = vadd.f32 %v365, %v366
        %vm370 = vcmask 1041409
        %v371 = vsel %vm370, %v367, %v346
        %v373 = vadd.f32 %v308, %v371
        %vm374 = vcmask 517120
        %375 = vst.msk [vmem:[#allocation2] sm:$0x3] %vm374, %v373
        %p376 = scmp.eq.s32.totalorder %s20, 3
        // Predicated region
        $region75: #{tpu_custom_call.1} parent=65 // pred_check
          %p377 = pneg %p376
        $region76: #{tpu_custom_call.1} parent=65 // pred_check_branch
          %379 = sbr.rel (%p377) target = $region78
        $region77: #{tpu_custom_call.1} parent=65 // pred_region
          %v380 = vld [vmem:[#allocation2] sm:$0x3]
          %v381 = vmul.f32 %v380, 0.00390625
          %v382 = vld [vmem:[%s298] sm:$0xff]
          %v383 = vld [vmem:[%s298 + $0x8] sm:$0xff]
          %v384 = vld [vmem:[%s298 + $0x10] sm:$0xff]
          %v385 = vld [vmem:[%s298 + $0x18] sm:$0xff]
          %v386 = vld [vmem:[%s298 + $0x20] sm:$0xff]
          %v387 = vld [vmem:[%s298 + $0x28] sm:$0xff]
          %v388 = vld [vmem:[%s298 + $0x30] sm:$0xff]
          %v389 = vld [vmem:[%s298 + $0x38] sm:$0xff]
          %v390 = vld [vmem:[%s301] sm:$0x1]
          %v392 = vperm.slane %v390, 0
          %v395 = vsel %vm325, %v381, 0
          %397 = vmatpush.msra.mxu0 0.0
          %398 = vmatpush.msra.mxu0 0.0
          %399 = vmatpush.msra.mxu0 0.0
          %400 = vmatpush.msra.mxu0 0.0
          %401 = vmatpush.msra.mxu0 0.0
          %402 = vmatpush.msra.mxu0 0.0
          %403 = vmatpush.msra.mxu0 0.0
          %404 = vmatpush.msra.mxu0 0.0
          %405 = vmatpush.msra.mxu0 %v389
          %406 = vmatpush.msra.mxu0 %v388
          %407 = vmatpush.msra.mxu0 %v387
          %408 = vmatpush.msra.mxu0 %v386
          %409 = vmatpush.msra.mxu0 %v385
          %410 = vmatpush.msra.mxu0 %v384
          %411 = vmatpush.msra.mxu0 %v383
          %412 = vmatpush.msra.mxu0 %v382
          %413 = vmatmul.f32.gmra.mxu0 %v395
          %v414 = vpop.f32.mrf.mxu0
          %v415 = vadd.f32 %v392, %v414
          %416 = vdwg.mxu0
          %417 = vst [vmem:[#allocation4] sm:$0x3] %v415
        $region78: #{tpu_custom_call.1} parent=65 // pred_fallthru
          _
        // Predicated region
        $region79: #{tpu_custom_call.1} parent=65 // pred_check
          %p418 = pneg %p123
        $region80: #{tpu_custom_call.1} parent=65 // pred_check_branch
          %420 = sbr.rel (%p418) target = $region82
        $region81: #{tpu_custom_call.1} parent=65 // pred_region
          %422 = vsyncadd [#allocation5], 0
          %s423 = smul.addr %s19, 2
          %s424 = scalar_lea.hbm %s3, %s423
          %s426 = sshll.u32 [#allocation4], 4
          %s427 = int_to_ptr.vmem [resolvable:$true] %s426
          %s428 = sshll.u32 %s424, 4
          %s429 = int_to_ptr.hbm [resolvable:$true] %s428
          %431 = dma.vmem_to_hbm [thread:$0]  %s427, 32, %s429, [#allocation5]
        $region82: #{tpu_custom_call.1} parent=65 // pred_fallthru
          _
        // Predicated region
        $region83: #{tpu_custom_call.1} parent=65 // pred_check
          %p432 = pneg %p123
        $region84: #{tpu_custom_call.1} parent=65 // pred_check_branch
          %434 = sbr.rel (%p432) target = $region86
        $region85: #{tpu_custom_call.1} parent=65 // pred_region
          %436 = dma.done [#allocation5], 32
        $region86: #{tpu_custom_call.1} parent=65 // pred_fallthru
          _
      $region66: #{tpu_custom_call.1} parent=5 // pred_fallthru
        _
      %p437 = scmp.le.s32.totalorder 2, %s10
      // Predicated region
      $region87: #{tpu_custom_call.1} parent=5 // pred_check
        %p438 = pneg %p437
      $region88: #{tpu_custom_call.1} parent=5 // pred_check_branch
        %440 = sbr.rel (%p438) target = $region90
      $region89: #{tpu_custom_call.1} parent=5 // pred_region
        %s441 = ssub.s32 %s10, 2
      $region90: #{tpu_custom_call.1} parent=5 // pred_fallthru
        _
    $region6: #{tpu_custom_call.1} parent=1 // loop_footer
      %s14 = sadd.s32 1, %s10
    $region7: #{tpu_custom_call.1} parent=1 // loop_footer_branch
      %9 = sbr.rel target = $region3
    $region8: #{tpu_custom_call.1} parent=1 // loop_exit
      _
    %442 = vsyncpa [#allocation5], 1
    %s443 = scalar_lea.sflag [#allocation5], 1
    %444 = vsyncpa %s443, 1

</llo_original>
